<compile_context>
chip_gen: v7x
topology: tpu7x:2x2x1
jax: 0.10.0
libtpu: 0.0.40
codegen_flags: <defaults>
</compile_context>

<pallas_src>
import functools

import jax
import jax.numpy as jnp
from jax.experimental import pallas as pl
from jax.experimental.pallas import tpu as pltpu


# ----------------------------------------------------------------------------
# Fused kernel: one batch element per grid step.
#   qkv = x @ W_qkv                       (one wide MXU matmul, all heads at once)
#   per head: softmax(mask(q k^T * C^-0.5)) @ v
#   y = concat(heads) @ Wp + bp           (fused projection, lane-dense store)
# ----------------------------------------------------------------------------
def _mha_fused_kernel(x_ref, wqkv_ref, wp_ref, bp_ref, o_ref, *,
                      num_heads, head_size, scale):
    x = x_ref[0]                                  # (T, C)
    T = x.shape[0]
    H, hs = num_heads, head_size
    Dh = H * hs

    # Single wide QKV matmul for all heads.
    qkv = jnp.dot(x, wqkv_ref[...], preferred_element_type=jnp.float32)   # (T, 3*H*hs)
    q_all = qkv[:, 0:Dh] * scale        # fold 1/sqrt(C) into q: T*hs work instead of T*T
    k_all = qkv[:, Dh:2 * Dh]
    v_all = qkv[:, 2 * Dh:3 * Dh]

    # Causal mask built in-register: keep where row >= col.
    row = jax.lax.broadcasted_iota(jnp.int32, (T, T), 0)
    col = jax.lax.broadcasted_iota(jnp.int32, (T, T), 1)
    causal = row >= col

    head_outs = []
    for h in range(H):                   # H is small & static -> unrolled at trace time
        q = q_all[:, h * hs:(h + 1) * hs]       # (T, hs)
        k = k_all[:, h * hs:(h + 1) * hs]
        v = v_all[:, h * hs:(h + 1) * hs]

        # q @ k^T as a contraction over the hs axis (no explicit transpose).
        scores = jax.lax.dot_general(
            q, k, dimension_numbers=(((1,), (1,)), ((), ())),
            preferred_element_type=jnp.float32)                           # (T, T)
        # Large finite negative instead of -inf (NaN-safe if masking ever changes).
        scores = jnp.where(causal, scores, -1e30)

        m = jnp.max(scores, axis=-1, keepdims=True)
        e = jnp.exp(scores - m)
        denom = jnp.sum(e, axis=-1, keepdims=True)
        p = e * pl.reciprocal(denom, approx=True)                         # EUP, not VALU

        head_outs.append(jnp.dot(p, v, preferred_element_type=jnp.float32))  # (T, hs)

    cat = jnp.concatenate(head_outs, axis=-1)                             # (T, H*hs) == (T, C)

    # Fused output projection -> lane-dense (T, C) store.
    y = jnp.dot(cat, wp_ref[...], preferred_element_type=jnp.float32) + bp_ref[...]
    o_ref[0] = y.astype(o_ref.dtype)


def multi_head_attention(x, params):
    """x: (B,T,C); params: wq/wk/wv (H,C,hs), wp (C,C), bp (1,C) -> (B,T,C)."""
    wq, wk, wv, wp, bp = (params["wq"], params["wk"], params["wv"],
                          params["wp"], params["bp"])
    B, T, C = x.shape
    H, _, hs = wq.shape
    scale = float(C) ** -0.5  # PyTorch code scales by C**-0.5 (n_embd), not head_size

    # Pack per-head weights into one (C, 3*H*hs) matrix: [Q heads | K heads | V heads].
    # (trace-time reshape, negligible)
    w_qkv = jnp.concatenate(
        [jnp.transpose(wq, (1, 0, 2)).reshape(C, H * hs),
         jnp.transpose(wk, (1, 0, 2)).reshape(C, H * hs),
         jnp.transpose(wv, (1, 0, 2)).reshape(C, H * hs)],
        axis=-1)

    kernel = functools.partial(_mha_fused_kernel,
                               num_heads=H, head_size=hs, scale=scale)

    return pl.pallas_call(
        kernel,
        out_shape=jax.ShapeDtypeStruct((B, T, C), x.dtype),
        grid_spec=pltpu.PrefetchScalarGridSpec(
            num_scalar_prefetch=0,
            grid=(B,),
            in_specs=[
                pl.BlockSpec((1, T, C), lambda b: (b, 0, 0)),            # x
                pl.BlockSpec((C, 3 * H * hs), lambda b: (0, 0)),         # packed W_qkv
                pl.BlockSpec((C, C), lambda b: (0, 0)),                  # W_proj
                pl.BlockSpec((1, C), lambda b: (0, 0)),                  # b_proj
            ],
            out_specs=pl.BlockSpec((1, T, C), lambda b: (b, 0, 0)),
        ),
        compiler_params=pltpu.CompilerParams(
            dimension_semantics=("parallel",)),   # batch axis parallel (2 TCs on v7x)
    )(x, w_qkv, wp, bp)


# ----------------------------------------------------------------------------
# Pure-JAX reference (mirrors the PyTorch module, eval mode)
# ----------------------------------------------------------------------------
def pure_jax_reference(x, params):
    wq, wk, wv, wp, bp = (params["wq"], params["wk"], params["wv"],
                          params["wp"], params["bp"])
    B, T, C = x.shape
    scale = float(C) ** -0.5
    tril = jnp.tril(jnp.ones((T, T), jnp.float32))
    outs = []
    for h in range(wq.shape[0]):
        q = x @ wq[h]
        k = x @ wk[h]
        v = x @ wv[h]
        wei = (q @ jnp.swapaxes(k, -2, -1)) * scale
        wei = jnp.where(tril == 0.0, -jnp.inf, wei)
        wei = jax.nn.softmax(wei, axis=-1)
        outs.append(wei @ v)
    cat = jnp.concatenate(outs, axis=-1)
    return cat @ wp + bp[0]


if __name__ == "__main__":
    # Small shapes consistent with the module:
    # num_heads=4, head_size=8, n_embd=32, block_size=8 (== T), dropout irrelevant (eval)
    B, T = 2, 8
    num_heads, head_size, n_embd, block_size = 4, 8, 32, 8
    assert num_heads * head_size == n_embd

    key = jax.random.PRNGKey(0)
    kx, kq, kk, kv, kw, kb = jax.random.split(key, 6)

    x = jax.random.normal(kx, (B, T, n_embd), dtype=jnp.float32)

    params = {
        "wq": 0.1 * jax.random.normal(kq, (num_heads, n_embd, head_size), jnp.float32),
        "wk": 0.1 * jax.random.normal(kk, (num_heads, n_embd, head_size), jnp.float32),
        "wv": 0.1 * jax.random.normal(kv, (num_heads, n_embd, head_size), jnp.float32),
        "wp": 0.1 * jax.random.normal(kw, (n_embd, n_embd), jnp.float32),
        "bp": 0.1 * jax.random.normal(kb, (1, n_embd), jnp.float32),
    }

    out = jax.block_until_ready(multi_head_attention(x, params))
    ref = pure_jax_reference(x, params)
    assert out.shape == (B, T, n_embd)
    # Tolerance accounts for the approximate (EUP) reciprocal in the softmax denominator.
    assert jnp.allclose(out, ref, atol=2e-3, rtol=2e-3), float(jnp.max(jnp.abs(out - ref)))
    print("KERNEL_OK")
</pallas_src>

<mosaic_0001>
module attributes {stable_mosaic.version = 11 : i64} {
  func.func @_mha_fused_kernel(%arg0: i32, %arg1: memref<1x8x32xf32, #tpu.memory_space<vmem>>, %arg2: memref<32x96xf32, #tpu.memory_space<vmem>>, %arg3: memref<32x32xf32, #tpu.memory_space<vmem>>, %arg4: memref<1x32xf32, #tpu.memory_space<vmem>>, %arg5: memref<1x8x32xf32, #tpu.memory_space<vmem>>) attributes {dimension_semantics = [#tpu.dimension_semantics<parallel>], iteration_bounds = array<i64: 2>, scalar_prefetch = 0 : i64, scratch_operands = 0 : i64, tpu.core_type = #tpu.core_type<tc>, window_params = [{transform_indices = @transform_0, window_bounds = array<i64: 1, 8, 32>}, {pipeline_mode = #tpu.pipeline_mode<synchronous>, transform_indices = @transform_1, window_bounds = array<i64: 32, 96>}, {pipeline_mode = #tpu.pipeline_mode<synchronous>, transform_indices = @transform_2, window_bounds = array<i64: 32, 32>}, {pipeline_mode = #tpu.pipeline_mode<synchronous>, transform_indices = @transform_3, window_bounds = array<i64: 1, 32>}, {transform_indices = @transform_4, window_bounds = array<i64: 1, 8, 32>}]} {
    %c0 = arith.constant 0 : index
    %c0_0 = arith.constant 0 : index
    %c0_1 = arith.constant 0 : index
    %0 = vector.load %arg1[%c0, %c0_0, %c0_1] : memref<1x8x32xf32, #tpu.memory_space<vmem>>, vector<1x8x32xf32>
    %1 = vector.shape_cast %0 : vector<1x8x32xf32> to vector<8x32xf32>
    %c0_2 = arith.constant 0 : index
    %c0_3 = arith.constant 0 : index
    %2 = vector.load %arg2[%c0_2, %c0_3] : memref<32x96xf32, #tpu.memory_space<vmem>>, vector<32x96xf32>
    %cst = arith.constant dense<0.000000e+00> : vector<8x96xf32>
    %3 = tpu.matmul %1, %2, %cst {dimension_numbers = #tpu.dot_dimension_numbers<[1], [0], [0], [1], [0, 0, 1, 1], [], []>} : vector<8x32xf32>, vector<32x96xf32>, vector<8x96xf32> -> vector<8x96xf32>
    %4 = vector.extract_strided_slice %3 {offsets = [0, 0], sizes = [8, 32], strides = [1, 1]} : vector<8x96xf32> to vector<8x32xf32>
    %cst_4 = arith.constant 0.176776692 : f32
    %5 = vector.broadcast %cst_4 : f32 to vector<8x32xf32>
    %6 = arith.mulf %4, %5 : vector<8x32xf32>
    %7 = vector.extract_strided_slice %3 {offsets = [0, 32], sizes = [8, 32], strides = [1, 1]} : vector<8x96xf32> to vector<8x32xf32>
    %8 = vector.extract_strided_slice %3 {offsets = [0, 64], sizes = [8, 32], strides = [1, 1]} : vector<8x96xf32> to vector<8x32xf32>
    %9 = tpu.iota {dimensions = array<i32: 0>} : vector<8x8xi32>
    %10 = tpu.iota {dimensions = array<i32: 1>} : vector<8x8xi32>
    %11 = arith.cmpi sge, %9, %10 : vector<8x8xi32>
    %12 = vector.extract_strided_slice %6 {offsets = [0, 0], sizes = [8, 8], strides = [1, 1]} : vector<8x32xf32> to vector<8x8xf32>
    %13 = vector.extract_strided_slice %7 {offsets = [0, 0], sizes = [8, 8], strides = [1, 1]} : vector<8x32xf32> to vector<8x8xf32>
    %14 = vector.extract_strided_slice %8 {offsets = [0, 0], sizes = [8, 8], strides = [1, 1]} : vector<8x32xf32> to vector<8x8xf32>
    %cst_5 = arith.constant dense<0.000000e+00> : vector<8x8xf32>
    %15 = tpu.matmul %12, %13, %cst_5 {dimension_numbers = #tpu.dot_dimension_numbers<[1], [1], [0], [0], [0, 0, 1, 0], [], []>} : vector<8x8xf32>, vector<8x8xf32>, vector<8x8xf32> -> vector<8x8xf32>
    %cst_6 = arith.constant -1.000000e+30 : f32
    %16 = vector.broadcast %cst_6 : f32 to vector<8x8xf32>
    %17 = arith.select %11, %15, %16 : vector<8x8xi1>, vector<8x8xf32>
    %cst_7 = arith.constant dense<0xFF800000> : vector<8xf32>
    %18 = vector.multi_reduction <maximumf>, %17, %cst_7 [1] : vector<8x8xf32> to vector<8xf32>
    %19 = vector.shape_cast %18 : vector<8xf32> to vector<8x1xf32>
    %20 = vector.broadcast %19 : vector<8x1xf32> to vector<8x8xf32>
    %21 = arith.subf %17, %20 : vector<8x8xf32>
    %22 = math.exp %21 : vector<8x8xf32>
    %cst_8 = arith.constant dense<0.000000e+00> : vector<8xf32>
    %23 = vector.multi_reduction <add>, %22, %cst_8 [1] : vector<8x8xf32> to vector<8xf32>
    %24 = vector.shape_cast %23 : vector<8xf32> to vector<8x1xf32>
    %25 = tpu.reciprocal %24 {approx = true} : vector<8x1xf32> -> vector<8x1xf32>
    %26 = vector.broadcast %25 : vector<8x1xf32> to vector<8x8xf32>
    %27 = arith.mulf %22, %26 : vector<8x8xf32>
    %cst_9 = arith.constant dense<0.000000e+00> : vector<8x8xf32>
    %28 = tpu.matmul %27, %14, %cst_9 {dimension_numbers = #tpu.dot_dimension_numbers<[1], [0], [0], [1], [0, 0, 1, 1], [], []>} : vector<8x8xf32>, vector<8x8xf32>, vector<8x8xf32> -> vector<8x8xf32>
    %29 = vector.extract_strided_slice %6 {offsets = [0, 8], sizes = [8, 8], strides = [1, 1]} : vector<8x32xf32> to vector<8x8xf32>
    %30 = vector.extract_strided_slice %7 {offsets = [0, 8], sizes = [8, 8], strides = [1, 1]} : vector<8x32xf32> to vector<8x8xf32>
    %31 = vector.extract_strided_slice %8 {offsets = [0, 8], sizes = [8, 8], strides = [1, 1]} : vector<8x32xf32> to vector<8x8xf32>
    %cst_10 = arith.constant dense<0.000000e+00> : vector<8x8xf32>
    %32 = tpu.matmul %29, %30, %cst_10 {dimension_numbers = #tpu.dot_dimension_numbers<[1], [1], [0], [0], [0, 0, 1, 0], [], []>} : vector<8x8xf32>, vector<8x8xf32>, vector<8x8xf32> -> vector<8x8xf32>
    %cst_11 = arith.constant -1.000000e+30 : f32
    %33 = vector.broadcast %cst_11 : f32 to vector<8x8xf32>
    %34 = arith.select %11, %32, %33 : vector<8x8xi1>, vector<8x8xf32>
    %cst_12 = arith.constant dense<0xFF800000> : vector<8xf32>
    %35 = vector.multi_reduction <maximumf>, %34, %cst_12 [1] : vector<8x8xf32> to vector<8xf32>
    %36 = vector.shape_cast %35 : vector<8xf32> to vector<8x1xf32>
    %37 = vector.broadcast %36 : vector<8x1xf32> to vector<8x8xf32>
    %38 = arith.subf %34, %37 : vector<8x8xf32>
    %39 = math.exp %38 : vector<8x8xf32>
    %cst_13 = arith.constant dense<0.000000e+00> : vector<8xf32>
    %40 = vector.multi_reduction <add>, %39, %cst_13 [1] : vector<8x8xf32> to vector<8xf32>
    %41 = vector.shape_cast %40 : vector<8xf32> to vector<8x1xf32>
    %42 = tpu.reciprocal %41 {approx = true} : vector<8x1xf32> -> vector<8x1xf32>
    %43 = vector.broadcast %42 : vector<8x1xf32> to vector<8x8xf32>
    %44 = arith.mulf %39, %43 : vector<8x8xf32>
    %cst_14 = arith.constant dense<0.000000e+00> : vector<8x8xf32>
    %45 = tpu.matmul %44, %31, %cst_14 {dimension_numbers = #tpu.dot_dimension_numbers<[1], [0], [0], [1], [0, 0, 1, 1], [], []>} : vector<8x8xf32>, vector<8x8xf32>, vector<8x8xf32> -> vector<8x8xf32>
    %46 = vector.extract_strided_slice %6 {offsets = [0, 16], sizes = [8, 8], strides = [1, 1]} : vector<8x32xf32> to vector<8x8xf32>
    %47 = vector.extract_strided_slice %7 {offsets = [0, 16], sizes = [8, 8], strides = [1, 1]} : vector<8x32xf32> to vector<8x8xf32>
    %48 = vector.extract_strided_slice %8 {offsets = [0, 16], sizes = [8, 8], strides = [1, 1]} : vector<8x32xf32> to vector<8x8xf32>
    %cst_15 = arith.constant dense<0.000000e+00> : vector<8x8xf32>
    %49 = tpu.matmul %46, %47, %cst_15 {dimension_numbers = #tpu.dot_dimension_numbers<[1], [1], [0], [0], [0, 0, 1, 0], [], []>} : vector<8x8xf32>, vector<8x8xf32>, vector<8x8xf32> -> vector<8x8xf32>
    %cst_16 = arith.constant -1.000000e+30 : f32
    %50 = vector.broadcast %cst_16 : f32 to vector<8x8xf32>
    %51 = arith.select %11, %49, %50 : vector<8x8xi1>, vector<8x8xf32>
    %cst_17 = arith.constant dense<0xFF800000> : vector<8xf32>
    %52 = vector.multi_reduction <maximumf>, %51, %cst_17 [1] : vector<8x8xf32> to vector<8xf32>
    %53 = vector.shape_cast %52 : vector<8xf32> to vector<8x1xf32>
    %54 = vector.broadcast %53 : vector<8x1xf32> to vector<8x8xf32>
    %55 = arith.subf %51, %54 : vector<8x8xf32>
    %56 = math.exp %55 : vector<8x8xf32>
    %cst_18 = arith.constant dense<0.000000e+00> : vector<8xf32>
    %57 = vector.multi_reduction <add>, %56, %cst_18 [1] : vector<8x8xf32> to vector<8xf32>
    %58 = vector.shape_cast %57 : vector<8xf32> to vector<8x1xf32>
    %59 = tpu.reciprocal %58 {approx = true} : vector<8x1xf32> -> vector<8x1xf32>
    %60 = vector.broadcast %59 : vector<8x1xf32> to vector<8x8xf32>
    %61 = arith.mulf %56, %60 : vector<8x8xf32>
    %cst_19 = arith.constant dense<0.000000e+00> : vector<8x8xf32>
    %62 = tpu.matmul %61, %48, %cst_19 {dimension_numbers = #tpu.dot_dimension_numbers<[1], [0], [0], [1], [0, 0, 1, 1], [], []>} : vector<8x8xf32>, vector<8x8xf32>, vector<8x8xf32> -> vector<8x8xf32>
    %63 = vector.extract_strided_slice %6 {offsets = [0, 24], sizes = [8, 8], strides = [1, 1]} : vector<8x32xf32> to vector<8x8xf32>
    %64 = vector.extract_strided_slice %7 {offsets = [0, 24], sizes = [8, 8], strides = [1, 1]} : vector<8x32xf32> to vector<8x8xf32>
    %65 = vector.extract_strided_slice %8 {offsets = [0, 24], sizes = [8, 8], strides = [1, 1]} : vector<8x32xf32> to vector<8x8xf32>
    %cst_20 = arith.constant dense<0.000000e+00> : vector<8x8xf32>
    %66 = tpu.matmul %63, %64, %cst_20 {dimension_numbers = #tpu.dot_dimension_numbers<[1], [1], [0], [0], [0, 0, 1, 0], [], []>} : vector<8x8xf32>, vector<8x8xf32>, vector<8x8xf32> -> vector<8x8xf32>
    %cst_21 = arith.constant -1.000000e+30 : f32
    %67 = vector.broadcast %cst_21 : f32 to vector<8x8xf32>
    %68 = arith.select %11, %66, %67 : vector<8x8xi1>, vector<8x8xf32>
    %cst_22 = arith.constant dense<0xFF800000> : vector<8xf32>
    %69 = vector.multi_reduction <maximumf>, %68, %cst_22 [1] : vector<8x8xf32> to vector<8xf32>
    %70 = vector.shape_cast %69 : vector<8xf32> to vector<8x1xf32>
    %71 = vector.broadcast %70 : vector<8x1xf32> to vector<8x8xf32>
    %72 = arith.subf %68, %71 : vector<8x8xf32>
    %73 = math.exp %72 : vector<8x8xf32>
    %cst_23 = arith.constant dense<0.000000e+00> : vector<8xf32>
    %74 = vector.multi_reduction <add>, %73, %cst_23 [1] : vector<8x8xf32> to vector<8xf32>
    %75 = vector.shape_cast %74 : vector<8xf32> to vector<8x1xf32>
    %76 = tpu.reciprocal %75 {approx = true} : vector<8x1xf32> -> vector<8x1xf32>
    %77 = vector.broadcast %76 : vector<8x1xf32> to vector<8x8xf32>
    %78 = arith.mulf %73, %77 : vector<8x8xf32>
    %cst_24 = arith.constant dense<0.000000e+00> : vector<8x8xf32>
    %79 = tpu.matmul %78, %65, %cst_24 {dimension_numbers = #tpu.dot_dimension_numbers<[1], [0], [0], [1], [0, 0, 1, 1], [], []>} : vector<8x8xf32>, vector<8x8xf32>, vector<8x8xf32> -> vector<8x8xf32>
    %80 = tpu.concatenate %28, %45, %62, %79 in 1 : vector<8x8xf32>, vector<8x8xf32>, vector<8x8xf32>, vector<8x8xf32> -> vector<8x32xf32>
    %c0_25 = arith.constant 0 : index
    %c0_26 = arith.constant 0 : index
    %81 = vector.load %arg3[%c0_25, %c0_26] : memref<32x32xf32, #tpu.memory_space<vmem>>, vector<32x32xf32>
    %cst_27 = arith.constant dense<0.000000e+00> : vector<8x32xf32>
    %82 = tpu.matmul %80, %81, %cst_27 {dimension_numbers = #tpu.dot_dimension_numbers<[1], [0], [0], [1], [0, 0, 1, 1], [], []>} : vector<8x32xf32>, vector<32x32xf32>, vector<8x32xf32> -> vector<8x32xf32>
    %c0_28 = arith.constant 0 : index
    %c0_29 = arith.constant 0 : index
    %83 = vector.load %arg4[%c0_28, %c0_29] : memref<1x32xf32, #tpu.memory_space<vmem>>, vector<1x32xf32>
    %84 = vector.broadcast %83 : vector<1x32xf32> to vector<8x32xf32>
    %85 = arith.addf %82, %84 : vector<8x32xf32>
    %c0_30 = arith.constant 0 : index
    %c0_31 = arith.constant 0 : index
    %c0_32 = arith.constant 0 : index
    %86 = vector.load %arg5[%c0_30, %c0_31, %c0_32] : memref<1x8x32xf32, #tpu.memory_space<vmem>>, vector<1x8x32xf32>
    %87 = vector.shape_cast %86 : vector<1x8x32xf32> to vector<8x32xf32>
    %88 = vector.shape_cast %85 : vector<8x32xf32> to vector<1x8x32xf32>
    tpu.vector_store %arg5[%c0_30, %c0_31, %c0_32], %88 {strides = array<i32>} : memref<1x8x32xf32, #tpu.memory_space<vmem>>, vector<1x8x32xf32>,
    return
  }
  func.func @transform_0(%arg0: i32) -> (i32, i32, i32) {
    %c0_i32 = arith.constant 0 : i32
    %c0_i32_0 = arith.constant 0 : i32
    %c0_i32_1 = arith.constant 0 : i32
    return %arg0, %c0_i32, %c0_i32_0 : i32, i32, i32
  }
  func.func @transform_1(%arg0: i32) -> (i32, i32) {
    %c0_i32 = arith.constant 0 : i32
    %c0_i32_0 = arith.constant 0 : i32
    %c0_i32_1 = arith.constant 0 : i32
    return %c0_i32, %c0_i32_0 : i32, i32
  }
  func.func @transform_2(%arg0: i32) -> (i32, i32) {
    %c0_i32 = arith.constant 0 : i32
    %c0_i32_0 = arith.constant 0 : i32
    %c0_i32_1 = arith.constant 0 : i32
    return %c0_i32, %c0_i32_0 : i32, i32
  }
  func.func @transform_3(%arg0: i32) -> (i32, i32) {
    %c0_i32 = arith.constant 0 : i32
    %c0_i32_0 = arith.constant 0 : i32
    %c0_i32_1 = arith.constant 0 : i32
    return %c0_i32, %c0_i32_0 : i32, i32
  }
  func.func @transform_4(%arg0: i32) -> (i32, i32, i32) {
    %c0_i32 = arith.constant 0 : i32
    %c0_i32_0 = arith.constant 0 : i32
    %c0_i32_1 = arith.constant 0 : i32
    return %arg0, %c0_i32, %c0_i32_0 : i32, i32, i32
  }
}

</mosaic_0001>

<llo_original>
// kernel: tpu_custom_call.1
$region0: #{tpu_custom_call.1}
  #allocation0 [shape = 'u32[]', space=smem, size = 0x4, offset = 0x4, fixed_abs, tag = 'smem constant byte address 0x4 - core index']
  #allocation1 [shape = 'u32[144,128]{1,0:T(1,128)}', space=vmem, size = 0x12000, scoped, tag = 'internal scratch']
  %s0 = inlined_call_operand.hbm [shape: f32[2,8,32], index: 0, kind: input, shape index: {}]
  %s1 = inlined_call_operand.hbm [shape: f32[32,96], index: 1, kind: input, shape index: {}]
  %s2 = inlined_call_operand.hbm [shape: f32[32,32], index: 2, kind: input, shape index: {}]
  %s3 = inlined_call_operand.vmem [shape: f32[1,32], index: 3, kind: input, shape index: {}]
  %s4 = inlined_call_operand.hbm [shape: f32[2,8,32], index: 4, kind: output, shape index: {}]
  %s5 = sld [smem:[#allocation0]]
  $region61: #{tpu_custom_call.1} parent=0
    _
  %s7 = ssub.s32 1, %s5
  %s8 = scalar_select 0, %s7, %s5
  $region1: #{tpu_custom_call.1} parent=0
    #allocation2 [shape = 'u8[8192]{0}', space=vmem, size = 0x2000, scoped, tag = 'input window, operand 0']
    #allocation3 [shape = 's32[2]{0}', space=sflag, size = 0x8, scoped, tag = 'scoped memory for tpu_custom_call.1']
    #allocation4 [shape = 's32[2]{0}', space=sflag, size = 0x8, scoped, tag = 'scoped memory for tpu_custom_call.1']
    #allocation5 [shape = 'u8[16384]{0}', space=vmem, size = 0x4000, scoped, tag = 'input window, operand 1, single buffered']
    #allocation6 [shape = 's32[1]{0}', space=sflag, size = 0x4, scoped, tag = 'scoped memory for tpu_custom_call.1']
    #allocation7 [shape = 'u8[16384]{0}', space=vmem, size = 0x4000, scoped, tag = 'input window, operand 2, single buffered']
    #allocation8 [shape = 'u8[8192]{0}', space=vmem, size = 0x2000, scoped, tag = 'output window, operand 0']
    %9 = vsyncpa [#allocation3], 0
    %s10 = scalar_lea.sflag [#allocation3], 1
    %11 = vsyncpa %s10, 0
    %12 = vsyncpa [#allocation6], 0
    %13 = vsyncpa [#allocation4], 0
    %s14 = scalar_lea.sflag [#allocation4], 1
    %15 = vsyncpa %s14, 0
    loop: start=0, step=1, limit=4
    $region2: #{tpu_custom_call.1} parent=1 // loop_pre_header
      _
    $region3: #{tpu_custom_call.1} parent=1 // loop_header
      %s17 = sphi 0, %s21
      %p18 = scmp.ge.s32.totalorder %s17, 4
      %s27 = sphi 0, %s29
      %s30 = sphi 0, %s27
      %s31 = sphi 0, %s30
      %s47 = sphi 0, %s31
      %s51 = sphi 0, %s51
      %s53 = sphi 0, %s51
      %s54 = sphi 0, %s53
      %s68 = sphi 0, %s54
      %s72 = sphi 0, %s72
      %s74 = sphi 0, %s72
      %s75 = sphi 0, %s74
      %s89 = sphi 0, %s75
      %s93 = sphi 0, %s93
      %s95 = sphi 0, %s93
      %s96 = sphi 0, %s95
      %s110 = sphi 0, %s96
      %s116 = sphi 0, %s118
      %s119 = sphi 0, %s116
      %s120 = sphi 0, %s119
      %s136 = sphi 0, %s120
    $region4: #{tpu_custom_call.1} parent=1 // loop_header_branch
      %20 = sbr.rel (%p18) target = $region8
    $region5: #{tpu_custom_call.1} parent=1 // loop_body
      %s22 = ssub.s32 %s17, 1
      %s23 = ssub.s32 %s17, 2
      %s24 = sadd.s32 %s17, 1
      %s25 = ssub.s32 %s17, %s24
      %p26 = scmp.eq.s32.totalorder %s25, 0
      %s28 = sadd.s32 %s27, 1
      %s29 = scalar_select %p26, %s27, %s28
      %p32 = pneg %p26
      %p33 = scmp.eq.s32.totalorder %s17, 1
      %p34 = por %p32, %p33
      %p35 = scmp.ne.s32.totalorder %s27, %s30
      %p36 = scmp.eq.s32.totalorder %s17, 0
      %p37 = por %p35, %p36
      %p38 = scmp.ne.s32.totalorder %s27, %s30
      %p39 = scmp.eq.s32.totalorder %s22, 1
      %p40 = por %p38, %p39
      %p41 = scmp.ne.s32.totalorder %s30, %s31
      %p42 = scmp.eq.s32.totalorder %s22, 0
      %p43 = por %p41, %p42
      %p44 = scmp.ne.s32.totalorder %s30, %s31
      %p45 = scmp.eq.s32.totalorder %s23, 1
      %p46 = por %p44, %p45
      %p48 = scmp.ne.s32.totalorder %s31, %s47
      %p49 = scmp.eq.s32.totalorder %s23, 0
      %p50 = por %p48, %p49
      %s52 = sadd.s32 %s51, 1
      %p55 = scmp.eq.s32.totalorder %s17, 1
      %p56 = scmp.ne.s32.totalorder %s51, %s53
      %p57 = scmp.eq.s32.totalorder %s17, 0
      %p58 = por %p56, %p57
      %p59 = scmp.ne.s32.totalorder %s51, %s53
      %p60 = scmp.eq.s32.totalorder %s22, 1
      %p61 = por %p59, %p60
      %p62 = scmp.ne.s32.totalorder %s53, %s54
      %p63 = scmp.eq.s32.totalorder %s22, 0
      %p64 = por %p62, %p63
      %p65 = scmp.ne.s32.totalorder %s53, %s54
      %p66 = scmp.eq.s32.totalorder %s23, 1
      %p67 = por %p65, %p66
      %p69 = scmp.ne.s32.totalorder %s54, %s68
      %p70 = scmp.eq.s32.totalorder %s23, 0
      %p71 = por %p69, %p70
      %s73 = sadd.s32 %s72, 1
      %p76 = scmp.eq.s32.totalorder %s17, 1
      %p77 = scmp.ne.s32.totalorder %s72, %s74
      %p78 = scmp.eq.s32.totalorder %s17, 0
      %p79 = por %p77, %p78
      %p80 = scmp.ne.s32.totalorder %s72, %s74
      %p81 = scmp.eq.s32.totalorder %s22, 1
      %p82 = por %p80, %p81
      %p83 = scmp.ne.s32.totalorder %s74, %s75
      %p84 = scmp.eq.s32.totalorder %s22, 0
      %p85 = por %p83, %p84
      %p86 = scmp.ne.s32.totalorder %s74, %s75
      %p87 = scmp.eq.s32.totalorder %s23, 1
      %p88 = por %p86, %p87
      %p90 = scmp.ne.s32.totalorder %s75, %s89
      %p91 = scmp.eq.s32.totalorder %s23, 0
      %p92 = por %p90, %p91
      %s94 = sadd.s32 %s93, 1
      %p97 = scmp.eq.s32.totalorder %s17, 1
      %p98 = scmp.ne.s32.totalorder %s93, %s95
      %p99 = scmp.eq.s32.totalorder %s17, 0
      %p100 = por %p98, %p99
      %p101 = scmp.ne.s32.totalorder %s93, %s95
      %p102 = scmp.eq.s32.totalorder %s22, 1
      %p103 = por %p101, %p102
      %p104 = scmp.ne.s32.totalorder %s95, %s96
      %p105 = scmp.eq.s32.totalorder %s22, 0
      %p106 = por %p104, %p105
      %p107 = scmp.ne.s32.totalorder %s95, %s96
      %p108 = scmp.eq.s32.totalorder %s23, 1
      %p109 = por %p107, %p108
      %p111 = scmp.ne.s32.totalorder %s96, %s110
      %p112 = scmp.eq.s32.totalorder %s23, 0
      %p113 = por %p111, %p112
      %s114 = ssub.s32 %s17, %s24
      %p115 = scmp.eq.s32.totalorder %s114, 0
      %s117 = sadd.s32 %s116, 1
      %s118 = scalar_select %p115, %s116, %s117
      %p121 = pneg %p115
      %p122 = scmp.eq.s32.totalorder %s17, 1
      %p123 = por %p121, %p122
      %p124 = scmp.ne.s32.totalorder %s116, %s119
      %p125 = scmp.eq.s32.totalorder %s17, 0
      %p126 = por %p124, %p125
      %p127 = scmp.ne.s32.totalorder %s116, %s119
      %p128 = scmp.eq.s32.totalorder %s22, 1
      %p129 = por %p127, %p128
      %p130 = scmp.ne.s32.totalorder %s119, %s120
      %p131 = scmp.eq.s32.totalorder %s22, 0
      %p132 = por %p130, %p131
      %p133 = scmp.ne.s32.totalorder %s119, %s120
      %p134 = scmp.eq.s32.totalorder %s23, 1
      %p135 = por %p133, %p134
      %p137 = scmp.ne.s32.totalorder %s120, %s136
      %p138 = scmp.eq.s32.totalorder %s23, 0
      %p139 = por %p137, %p138
      %p140 = scmp.le.s32.totalorder 1, %s17
      %p141 = scmp.lt.s32.totalorder %s17, 3
      %p142 = pnand %p140, %p141
      %p143 = pneg %p142
      // Predicated region
      $region9: #{tpu_custom_call.1} parent=5 // pred_check
        _
      $region10: #{tpu_custom_call.1} parent=5 // pred_check_branch
        %145 = sbr.rel (%p142) target = $region12
      $region11: #{tpu_custom_call.1} parent=5 // pred_region
        %s146 = ssub.s32 %s17, 1
        // Predicated region
        $region13: #{tpu_custom_call.1} parent=11 // pred_check
          %p147 = pneg %p64
        $region14: #{tpu_custom_call.1} parent=11 // pred_check_branch
          %149 = sbr.rel (%p147) target = $region16
        $region15: #{tpu_custom_call.1} parent=11 // pred_region
          %s151 = ssub.s32 512, 512
          %152 = vsyncadd [#allocation6], %s151
          %s153 = sshll.u32 [#allocation5], 4
          %s154 = int_to_ptr.vmem [resolvable:$true] %s153
          %159 = dma.hbm_to_vmem [thread:$0]  %s1, 512, %s154, [#allocation6], 128, 128, 8
        $region16: #{tpu_custom_call.1} parent=11 // pred_fallthru
          _
        // Predicated region
        $region17: #{tpu_custom_call.1} parent=11 // pred_check
          %p160 = pneg %p85
        $region18: #{tpu_custom_call.1} parent=11 // pred_check_branch
          %162 = sbr.rel (%p160) target = $region20
        $region19: #{tpu_custom_call.1} parent=11 // pred_region
          %s164 = ssub.s32 512, 512
          %165 = vsyncadd [#allocation6], %s164
          %s166 = sshll.u32 [#allocation7], 4
          %s167 = int_to_ptr.vmem [resolvable:$true] %s166
          %172 = dma.hbm_to_vmem [thread:$0]  %s2, 512, %s167, [#allocation6], 128, 128, 8
        $region20: #{tpu_custom_call.1} parent=11 // pred_fallthru
          _
        // Predicated region
        $region21: #{tpu_custom_call.1} parent=11 // pred_check
          %p173 = pneg %p106
        $region22: #{tpu_custom_call.1} parent=11 // pred_check_branch
          %175 = sbr.rel (%p173) target = $region24
        $region23: #{tpu_custom_call.1} parent=11 // pred_region
          _
        $region24: #{tpu_custom_call.1} parent=11 // pred_fallthru
          _
      $region12: #{tpu_custom_call.1} parent=5 // pred_fallthru
        _
      %p176 = scmp.lt.s32.totalorder %s17, 2
      // Predicated region
      $region25: #{tpu_custom_call.1} parent=5 // pred_check
        %p177 = pneg %p176
      $region26: #{tpu_custom_call.1} parent=5 // pred_check_branch
        %179 = sbr.rel (%p177) target = $region28
      $region27: #{tpu_custom_call.1} parent=5 // pred_region
        // Predicated region
        $region29: #{tpu_custom_call.1} parent=27 // pred_check
          %p180 = pneg %p37
        $region30: #{tpu_custom_call.1} parent=27 // pred_check_branch
          %182 = sbr.rel (%p180) target = $region32
        $region31: #{tpu_custom_call.1} parent=27 // pred_region
          %s183 = sand.u32 %s27, 1
          %s184 = scalar_lea.sflag [#allocation3], %s183
          %s185 = sand.u32 %s27, 1
          %s186 = smul.addr %s185, 8
          %s187 = scalar_lea.vmem [#allocation2], %s186
          %s189 = ssub.s32 128, 128
          %190 = vsyncadd %s184, %s189
          %s191 = smul.addr %s17, 128
          %s192 = scalar_lea.hbm %s0, %s191
          %s194 = sshll.u32 %s187, 4
          %s195 = int_to_ptr.vmem [resolvable:$true] %s194
          %197 = dma.hbm_to_vmem [thread:$0]  %s192, 128, %s195, %s184
        $region32: #{tpu_custom_call.1} parent=27 // pred_fallthru
          _
      $region28: #{tpu_custom_call.1} parent=5 // pred_fallthru
        _
      %p198 = scmp.le.s32.totalorder 1, %s17
      %p199 = scmp.lt.s32.totalorder %s17, 3
      %p200 = pnand %p198, %p199
      %p201 = pneg %p200
      // Predicated region
      $region33: #{tpu_custom_call.1} parent=5 // pred_check
        _
      $region34: #{tpu_custom_call.1} parent=5 // pred_check_branch
        %203 = sbr.rel (%p200) target = $region36
      $region35: #{tpu_custom_call.1} parent=5 // pred_region
        %s204 = ssub.s32 %s17, 1
        %s205 = sand.u32 %s30, 1
        %s206 = scalar_lea.sflag [#allocation3], %s205
        %s207 = sand.u32 %s30, 1
        %s208 = smul.addr %s207, 8
        %s209 = scalar_lea.vmem [#allocation2], %s208
        // Predicated region
        $region37: #{tpu_custom_call.1} parent=35 // pred_check
          %p210 = pneg %p43
        $region38: #{tpu_custom_call.1} parent=35 // pred_check_branch
          %212 = sbr.rel (%p210) target = $region40
        $region39: #{tpu_custom_call.1} parent=35 // pred_region
          %213 = dma.done %s206, 128
        $region40: #{tpu_custom_call.1} parent=35 // pred_fallthru
          _
        // Predicated region
        $region41: #{tpu_custom_call.1} parent=35 // pred_check
          %p214 = pneg %p64
        $region42: #{tpu_custom_call.1} parent=35 // pred_check_branch
          %216 = sbr.rel (%p214) target = $region44
        $region43: #{tpu_custom_call.1} parent=35 // pred_region
          %217 = dma.done [#allocation6], 512
        $region44: #{tpu_custom_call.1} parent=35 // pred_fallthru
          _
        // Predicated region
        $region45: #{tpu_custom_call.1} parent=35 // pred_check
          %p218 = pneg %p85
        $region46: #{tpu_custom_call.1} parent=35 // pred_check_branch
          %220 = sbr.rel (%p218) target = $region48
        $region47: #{tpu_custom_call.1} parent=35 // pred_region
          %221 = dma.done [#allocation6], 512
        $region48: #{tpu_custom_call.1} parent=35 // pred_fallthru
          _
        %s222 = sand.u32 %s30, 1
        %s223 = scalar_lea.sflag [#allocation3], %s222
        %s224 = sand.u32 %s30, 1
        %s225 = smul.addr %s224, 8
        %s226 = scalar_lea.vmem [#allocation2], %s225
        %p227 = pneg %p43
        %p228 = pneg %p40
        %p229 = pneg %p64
        %p230 = pneg %p61
        %p231 = pneg %p85
        %p232 = pneg %p82
        %p233 = pneg %p106
        %p234 = pneg %p103
        %p235 = pneg %p132
        %p236 = pneg %p129
        %s237 = sand.u32 %s119, 1
        %s238 = scalar_lea.sflag [#allocation4], %s237
        %s239 = sand.u32 %s119, 1
        %s240 = smul.addr %s239, 8
        %s241 = scalar_lea.vmem [#allocation8], %s240
        %v242 = vld [vmem:[%s209] sm:$0xff]
        %v243 = vld [vmem:[#allocation5] sm:$0xff]
        %v244 = vld [vmem:[#allocation5 + $0x8] sm:$0xff]
        %v245 = vld [vmem:[#allocation5 + $0x10] sm:$0xff]
        %v246 = vld [vmem:[#allocation5 + $0x18] sm:$0xff]
        %vm247 = vcmask 261120
        %v249 = vsel %vm247, %v242, 0
        %251 = vmatprep.subr.mxu0 0.0
        %252 = vmatpush1.msra.mxu0 %v243
        %253 = vmatprep.subr.mxu0 0.0
        %254 = vmatpush1.msra.mxu0 %v244
        %255 = vmatprep.subr.mxu0 0.0
        %256 = vmatpush1.msra.mxu0 %v245
        %257 = vmatprep.subr.mxu0 0.0
        %258 = vmatpush1.msra.mxu0 %v246
        %259 = vmatprep.subr.mxu0 0.0
        %260 = vmatpush1.msra.mxu0 0.0
        %261 = vmatprep.subr.mxu0 0.0
        %262 = vmatpush1.msra.mxu0 0.0
        %263 = vmatprep.subr.mxu0 0.0
        %264 = vmatpush1.msra.mxu0 0.0
        %265 = vmatprep.subr.mxu0 0.0
        %266 = vmatpush1.msra.mxu0 0.0
        %267 = vmatprep.subr.mxu0 0.0
        %268 = vmatpush1.msra.mxu0 0.0
        %269 = vmatprep.subr.mxu0 0.0
        %270 = vmatpush1.msra.mxu0 0.0
        %271 = vmatprep.subr.mxu0 0.0
        %272 = vmatpush1.msra.mxu0 0.0
        %273 = vmatprep.subr.mxu0 0.0
        %274 = vmatpush1.msra.mxu0 0.0
        %275 = vmatprep.subr.mxu0 0.0
        %276 = vmatpush1.msra.mxu0 0.0
        %277 = vmatprep.subr.mxu0 0.0
        %278 = vmatpush1.msra.mxu0 0.0
        %279 = vmatprep.subr.mxu0 0.0
        %280 = vmatpush1.msra.mxu0 0.0
        %281 = vmatprep.subr.mxu0 0.0
        %282 = vmatpush1.msra.mxu0 0.0
        %283 = vmatprep.subr.mxu0 0.0
        %284 = vmatpush1.msra.mxu0 0.0
        %285 = vmatprep.subr.mxu0 0.0
        %286 = vmatpush1.msra.mxu0 0.0
        %287 = vmatprep.subr.mxu0 0.0
        %288 = vmatpush1.msra.mxu0 0.0
        %289 = vmatprep.subr.mxu0 0.0
        %290 = vmatpush1.msra.mxu0 0.0
        %291 = vmatprep.subr.mxu0 0.0
        %292 = vmatpush1.msra.mxu0 0.0
        %293 = vmatprep.subr.mxu0 0.0
        %294 = vmatpush1.msra.mxu0 0.0
        %295 = vmatprep.subr.mxu0 0.0
        %296 = vmatpush1.msra.mxu0 0.0
        %297 = vmatprep.subr.mxu0 0.0
        %298 = vmatpush1.msra.mxu0 0.0
        %299 = vmatprep.subr.mxu0 0.0
        %300 = vmatpush1.msra.mxu0 0.0
        %301 = vmatprep.subr.mxu0 0.0
        %302 = vmatpush1.msra.mxu0 0.0
        %303 = vmatprep.subr.mxu0 0.0
        %304 = vmatpush1.msra.mxu0 0.0
        %305 = vmatprep.subr.mxu0 0.0
        %306 = vmatpush1.msra.mxu0 0.0
        %307 = vmatprep.subr.mxu0 0.0
        %308 = vmatpush1.msra.mxu0 0.0
        %309 = vmatprep.subr.mxu0 0.0
        %310 = vmatpush1.msra.mxu0 0.0
        %311 = vmatprep.subr.mxu0 0.0
        %312 = vmatpush1.msra.mxu0 0.0
        %313 = vmatprep.subr.mxu0 0.0
        %314 = vmatpush1.msra.mxu0 0.0
        %315 = vmatprep.mubr.f32.mxu0 0.0
        %316 = vmatmul.mubr.f32.gmra.mrb[0].mxu0 %v249
        %v317 = vpop.f32.mrb[0].mxu0
        %v318 = vadd.f32 0.0, %v317
        %v319 = vpop.f32.mrb[0].mxu0
        %320 = vdwg.mxu0
        %v321 = vmul.f32 %v318, 0.17677669
        %v322 = vlaneseq
        %v323 = vshrl.u32 %v322, 7
        %v324 = vlaneseq
        %v325 = vand.u32 %v324, 127
        %vm326 = vcmp.ge.s32.totalorder %v323, %v325
        %328 = vrot.lane.b32.xlu0 %v318, 96
        %v329 = vpop.permute.xlu0 %328
        %vm330 = vcmask 64512
        %v332 = vsel %vm330, %v321, 0
        %v334 = vsel %vm330, %v329, 0
        %336 = vmatprep.subr.mxu0 0.0
        %337 = vmatpush1.xpose.msra.mxu0 %v334
        %338 = vmatprep.subr.mxu0 0.0
        %339 = vmatpush1.xpose.msra.mxu0 0.0
        %340 = vmatprep.subr.mxu0 0.0
        %341 = vmatpush1.xpose.msra.mxu0 0.0
        %342 = vmatprep.subr.mxu0 0.0
        %343 = vmatpush1.xpose.msra.mxu0 0.0
        %344 = vmatprep.subr.mxu0 0.0
        %345 = vmatpush1.xpose.msra.mxu0 0.0
        %346 = vmatprep.subr.mxu0 0.0
        %347 = vmatpush1.xpose.msra.mxu0 0.0
        %348 = vmatprep.subr.mxu0 0.0
        %349 = vmatpush1.xpose.msra.mxu0 0.0
        %350 = vmatprep.subr.mxu0 0.0
        %351 = vmatpush1.xpose.msra.mxu0 0.0
        %352 = vmatprep.subr.mxu0 0.0
        %353 = vmatpush1.xpose.msra.mxu0 0.0
        %354 = vmatprep.subr.mxu0 0.0
        %355 = vmatpush1.xpose.msra.mxu0 0.0
        %356 = vmatprep.subr.mxu0 0.0
        %357 = vmatpush1.xpose.msra.mxu0 0.0
        %358 = vmatprep.subr.mxu0 0.0
        %359 = vmatpush1.xpose.msra.mxu0 0.0
        %360 = vmatprep.subr.mxu0 0.0
        %361 = vmatpush1.xpose.msra.mxu0 0.0
        %362 = vmatprep.subr.mxu0 0.0
        %363 = vmatpush1.xpose.msra.mxu0 0.0
        %364 = vmatprep.subr.mxu0 0.0
        %365 = vmatpush1.xpose.msra.mxu0 0.0
        %366 = vmatprep.subr.mxu0 0.0
        %367 = vmatpush1.xpose.msra.mxu0 0.0
        %368 = vmatprep.subr.mxu0 0.0
        %369 = vmatpush1.xpose.msra.mxu0 0.0
        %370 = vmatprep.subr.mxu0 0.0
        %371 = vmatpush1.xpose.msra.mxu0 0.0
        %372 = vmatprep.subr.mxu0 0.0
        %373 = vmatpush1.xpose.msra.mxu0 0.0
        %374 = vmatprep.subr.mxu0 0.0
        %375 = vmatpush1.xpose.msra.mxu0 0.0
        %376 = vmatprep.subr.mxu0 0.0
        %377 = vmatpush1.xpose.msra.mxu0 0.0
        %378 = vmatprep.subr.mxu0 0.0
        %379 = vmatpush1.xpose.msra.mxu0 0.0
        %380 = vmatprep.subr.mxu0 0.0
        %381 = vmatpush1.xpose.msra.mxu0 0.0
        %382 = vmatprep.subr.mxu0 0.0
        %383 = vmatpush1.xpose.msra.mxu0 0.0
        %384 = vmatprep.subr.mxu0 0.0
        %385 = vmatpush1.xpose.msra.mxu0 0.0
        %386 = vmatprep.subr.mxu0 0.0
        %387 = vmatpush1.xpose.msra.mxu0 0.0
        %388 = vmatprep.subr.mxu0 0.0
        %389 = vmatpush1.xpose.msra.mxu0 0.0
        %390 = vmatprep.subr.mxu0 0.0
        %391 = vmatpush1.xpose.msra.mxu0 0.0
        %392 = vmatprep.subr.mxu0 0.0
        %393 = vmatpush1.xpose.msra.mxu0 0.0
        %394 = vmatprep.subr.mxu0 0.0
        %395 = vmatpush1.xpose.msra.mxu0 0.0
        %396 = vmatprep.subr.mxu0 0.0
        %397 = vmatpush1.xpose.msra.mxu0 0.0
        %398 = vmatprep.subr.mxu0 0.0
        %399 = vmatpush1.xpose.msra.mxu0 0.0
        %400 = vmatprep.mubr.f32.mxu0 0.0
        %401 = vmatmul.mubr.f32.gmra.mrb[0].mxu0 %v332
        %v402 = vpop.f32.mrb[0].mxu0
        %v403 = vadd.f32 0.0, %v402
        %v404 = vpop.f32.mrb[0].mxu0
        %405 = vdwg.mxu0
        %v406 = vsel %vm326, %v403, -1e+30
        %v407 = vsel %vm330, %v406, -inf
        %408 = vmax.xlane.f32.xlu0 %v407
        %v409 = vpop.xlane.xlu0 %408
        %v410 = vsub.f32 %v406, %v409
        %v411 = vmul.f32 %v410, 1.442695
        %v412 = vpow.pop %v411
        %v413 = vsel %vm330, %v412, 0.0
        %414 = vadd.xlane.f32.xlu0 %v413
        %v415 = vpop.xlane.xlu0 %414
        %v416 = vrcp.pop %v415
        %v417 = vmul.f32 %v412, %v416
        %418 = vrot.lane.b32.xlu0 %v318, 64
        %v419 = vpop.permute.xlu0 %418
        %v422 = vsel %vm330, %v417, 0
        %424 = vmatprep.subr.mxu0 0.0
        %425 = vmatpush1.msra.mxu0 %v419
        %426 = vmatprep.subr.mxu0 0.0
        %427 = vmatpush1.msra.mxu0 0.0
        %428 = vmatprep.subr.mxu0 0.0
        %429 = vmatpush1.msra.mxu0 0.0
        %430 = vmatprep.subr.mxu0 0.0
        %431 = vmatpush1.msra.mxu0 0.0
        %432 = vmatprep.subr.mxu0 0.0
        %433 = vmatpush1.msra.mxu0 0.0
        %434 = vmatprep.subr.mxu0 0.0
        %435 = vmatpush1.msra.mxu0 0.0
        %436 = vmatprep.subr.mxu0 0.0
        %437 = vmatpush1.msra.mxu0 0.0
        %438 = vmatprep.subr.mxu0 0.0
        %439 = vmatpush1.msra.mxu0 0.0
        %440 = vmatprep.subr.mxu0 0.0
        %441 = vmatpush1.msra.mxu0 0.0
        %442 = vmatprep.subr.mxu0 0.0
        %443 = vmatpush1.msra.mxu0 0.0
        %444 = vmatprep.subr.mxu0 0.0
        %445 = vmatpush1.msra.mxu0 0.0
        %446 = vmatprep.subr.mxu0 0.0
        %447 = vmatpush1.msra.mxu0 0.0
        %448 = vmatprep.subr.mxu0 0.0
        %449 = vmatpush1.msra.mxu0 0.0
        %450 = vmatprep.subr.mxu0 0.0
        %451 = vmatpush1.msra.mxu0 0.0
        %452 = vmatprep.subr.mxu0 0.0
        %453 = vmatpush1.msra.mxu0 0.0
        %454 = vmatprep.subr.mxu0 0.0
        %455 = vmatpush1.msra.mxu0 0.0
        %456 = vmatprep.subr.mxu0 0.0
        %457 = vmatpush1.msra.mxu0 0.0
        %458 = vmatprep.subr.mxu0 0.0
        %459 = vmatpush1.msra.mxu0 0.0
        %460 = vmatprep.subr.mxu0 0.0
        %461 = vmatpush1.msra.mxu0 0.0
        %462 = vmatprep.subr.mxu0 0.0
        %463 = vmatpush1.msra.mxu0 0.0
        %464 = vmatprep.subr.mxu0 0.0
        %465 = vmatpush1.msra.mxu0 0.0
        %466 = vmatprep.subr.mxu0 0.0
        %467 = vmatpush1.msra.mxu0 0.0
        %468 = vmatprep.subr.mxu0 0.0
        %469 = vmatpush1.msra.mxu0 0.0
        %470 = vmatprep.subr.mxu0 0.0
        %471 = vmatpush1.msra.mxu0 0.0
        %472 = vmatprep.subr.mxu0 0.0
        %473 = vmatpush1.msra.mxu0 0.0
        %474 = vmatprep.subr.mxu0 0.0
        %475 = vmatpush1.msra.mxu0 0.0
        %476 = vmatprep.subr.mxu0 0.0
        %477 = vmatpush1.msra.mxu0 0.0
        %478 = vmatprep.subr.mxu0 0.0
        %479 = vmatpush1.msra.mxu0 0.0
        %480 = vmatprep.subr.mxu0 0.0
        %481 = vmatpush1.msra.mxu0 0.0
        %482 = vmatprep.subr.mxu0 0.0
        %483 = vmatpush1.msra.mxu0 0.0
        %484 = vmatprep.subr.mxu0 0.0
        %485 = vmatpush1.msra.mxu0 0.0
        %486 = vmatprep.subr.mxu0 0.0
        %487 = vmatpush1.msra.mxu0 0.0
        %488 = vmatprep.mubr.f32.mxu0 0.0
        %489 = vmatmul.mubr.f32.gmra.mrb[0].mxu0 %v422
        %v490 = vpop.f32.mrb[0].mxu0
        %v491 = vadd.f32 0.0, %v490
        %v492 = vpop.f32.mrb[0].mxu0
        %493 = vdwg.mxu0
        %494 = vrot.lane.b32.xlu0 %v321, 120
        %v495 = vpop.permute.xlu0 %494
        %496 = vrot.lane.b32.xlu0 %v318, 88
        %v497 = vpop.permute.xlu0 %496
        %v498 = vsel %vm330, %v495, 0
        %v500 = vsel %vm330, %v497, 0
        %502 = vmatprep.subr.mxu0 0.0
        %503 = vmatpush1.xpose.msra.mxu0 %v500
        %504 = vmatprep.subr.mxu0 0.0
        %505 = vmatpush1.xpose.msra.mxu0 0.0
        %506 = vmatprep.subr.mxu0 0.0
        %507 = vmatpush1.xpose.msra.mxu0 0.0
        %508 = vmatprep.subr.mxu0 0.0
        %509 = vmatpush1.xpose.msra.mxu0 0.0
        %510 = vmatprep.subr.mxu0 0.0
        %511 = vmatpush1.xpose.msra.mxu0 0.0
        %512 = vmatprep.subr.mxu0 0.0
        %513 = vmatpush1.xpose.msra.mxu0 0.0
        %514 = vmatprep.subr.mxu0 0.0
        %515 = vmatpush1.xpose.msra.mxu0 0.0
        %516 = vmatprep.subr.mxu0 0.0
        %517 = vmatpush1.xpose.msra.mxu0 0.0
        %518 = vmatprep.subr.mxu0 0.0
        %519 = vmatpush1.xpose.msra.mxu0 0.0
        %520 = vmatprep.subr.mxu0 0.0
        %521 = vmatpush1.xpose.msra.mxu0 0.0
        %522 = vmatprep.subr.mxu0 0.0
        %523 = vmatpush1.xpose.msra.mxu0 0.0
        %524 = vmatprep.subr.mxu0 0.0
        %525 = vmatpush1.xpose.msra.mxu0 0.0
        %526 = vmatprep.subr.mxu0 0.0
        %527 = vmatpush1.xpose.msra.mxu0 0.0
        %528 = vmatprep.subr.mxu0 0.0
        %529 = vmatpush1.xpose.msra.mxu0 0.0
        %530 = vmatprep.subr.mxu0 0.0
        %531 = vmatpush1.xpose.msra.mxu0 0.0
        %532 = vmatprep.subr.mxu0 0.0
        %533 = vmatpush1.xpose.msra.mxu0 0.0
        %534 = vmatprep.subr.mxu0 0.0
        %535 = vmatpush1.xpose.msra.mxu0 0.0
        %536 = vmatprep.subr.mxu0 0.0
        %537 = vmatpush1.xpose.msra.mxu0 0.0
        %538 = vmatprep.subr.mxu0 0.0
        %539 = vmatpush1.xpose.msra.mxu0 0.0
        %540 = vmatprep.subr.mxu0 0.0
        %541 = vmatpush1.xpose.msra.mxu0 0.0
        %542 = vmatprep.subr.mxu0 0.0
        %543 = vmatpush1.xpose.msra.mxu0 0.0
        %544 = vmatprep.subr.mxu0 0.0
        %545 = vmatpush1.xpose.msra.mxu0 0.0
        %546 = vmatprep.subr.mxu0 0.0
        %547 = vmatpush1.xpose.msra.mxu0 0.0
        %548 = vmatprep.subr.mxu0 0.0
        %549 = vmatpush1.xpose.msra.mxu0 0.0
        %550 = vmatprep.subr.mxu0 0.0
        %551 = vmatpush1.xpose.msra.mxu0 0.0
        %552 = vmatprep.subr.mxu0 0.0
        %553 = vmatpush1.xpose.msra.mxu0 0.0
        %554 = vmatprep.subr.mxu0 0.0
        %555 = vmatpush1.xpose.msra.mxu0 0.0
        %556 = vmatprep.subr.mxu0 0.0
        %557 = vmatpush1.xpose.msra.mxu0 0.0
        %558 = vmatprep.subr.mxu0 0.0
        %559 = vmatpush1.xpose.msra.mxu0 0.0
        %560 = vmatprep.subr.mxu0 0.0
        %561 = vmatpush1.xpose.msra.mxu0 0.0
        %562 = vmatprep.subr.mxu0 0.0
        %563 = vmatpush1.xpose.msra.mxu0 0.0
        %564 = vmatprep.subr.mxu0 0.0
        %565 = vmatpush1.xpose.msra.mxu0 0.0
        %566 = vmatprep.mubr.f32.mxu0 0.0
        %567 = vmatmul.mubr.f32.gmra.mrb[0].mxu0 %v498
        %v568 = vpop.f32.mrb[0].mxu0
        %v569 = vadd.f32 0.0, %v568
        %v570 = vpop.f32.mrb[0].mxu0
        %571 = vdwg.mxu0
        %v572 = vsel %vm326, %v569, -1e+30
        %v573 = vsel %vm330, %v572, -inf
        %574 = vmax.xlane.f32.xlu0 %v573
        %v575 = vpop.xlane.xlu0 %574
        %v576 = vsub.f32 %v572, %v575
        %v577 = vmul.f32 %v576, 1.442695
        %v578 = vpow.pop %v577
        %v579 = vsel %vm330, %v578, 0.0
        %580 = vadd.xlane.f32.xlu0 %v579
        %v581 = vpop.xlane.xlu0 %580
        %v582 = vrcp.pop %v581
        %v583 = vmul.f32 %v578, %v582
        %584 = vrot.lane.b32.xlu0 %v318, 56
        %v585 = vpop.permute.xlu0 %584
        %v588 = vsel %vm330, %v583, 0
        %590 = vmatprep.subr.mxu0 0.0
        %591 = vmatpush1.msra.mxu0 %v585
        %592 = vmatprep.subr.mxu0 0.0
        %593 = vmatpush1.msra.mxu0 0.0
        %594 = vmatprep.subr.mxu0 0.0
        %595 = vmatpush1.msra.mxu0 0.0
        %596 = vmatprep.subr.mxu0 0.0
        %597 = vmatpush1.msra.mxu0 0.0
        %598 = vmatprep.subr.mxu0 0.0
        %599 = vmatpush1.msra.mxu0 0.0
        %600 = vmatprep.subr.mxu0 0.0
        %601 = vmatpush1.msra.mxu0 0.0
        %602 = vmatprep.subr.mxu0 0.0
        %603 = vmatpush1.msra.mxu0 0.0
        %604 = vmatprep.subr.mxu0 0.0
        %605 = vmatpush1.msra.mxu0 0.0
        %606 = vmatprep.subr.mxu0 0.0
        %607 = vmatpush1.msra.mxu0 0.0
        %608 = vmatprep.subr.mxu0 0.0
        %609 = vmatpush1.msra.mxu0 0.0
        %610 = vmatprep.subr.mxu0 0.0
        %611 = vmatpush1.msra.mxu0 0.0
        %612 = vmatprep.subr.mxu0 0.0
        %613 = vmatpush1.msra.mxu0 0.0
        %614 = vmatprep.subr.mxu0 0.0
        %615 = vmatpush1.msra.mxu0 0.0
        %616 = vmatprep.subr.mxu0 0.0
        %617 = vmatpush1.msra.mxu0 0.0
        %618 = vmatprep.subr.mxu0 0.0
        %619 = vmatpush1.msra.mxu0 0.0
        %620 = vmatprep.subr.mxu0 0.0
        %621 = vmatpush1.msra.mxu0 0.0
        %622 = vmatprep.subr.mxu0 0.0
        %623 = vmatpush1.msra.mxu0 0.0
        %624 = vmatprep.subr.mxu0 0.0
        %625 = vmatpush1.msra.mxu0 0.0
        %626 = vmatprep.subr.mxu0 0.0
        %627 = vmatpush1.msra.mxu0 0.0
        %628 = vmatprep.subr.mxu0 0.0
        %629 = vmatpush1.msra.mxu0 0.0
        %630 = vmatprep.subr.mxu0 0.0
        %631 = vmatpush1.msra.mxu0 0.0
        %632 = vmatprep.subr.mxu0 0.0
        %633 = vmatpush1.msra.mxu0 0.0
        %634 = vmatprep.subr.mxu0 0.0
        %635 = vmatpush1.msra.mxu0 0.0
        %636 = vmatprep.subr.mxu0 0.0
        %637 = vmatpush1.msra.mxu0 0.0
        %638 = vmatprep.subr.mxu0 0.0
        %639 = vmatpush1.msra.mxu0 0.0
        %640 = vmatprep.subr.mxu0 0.0
        %641 = vmatpush1.msra.mxu0 0.0
        %642 = vmatprep.subr.mxu0 0.0
        %643 = vmatpush1.msra.mxu0 0.0
        %644 = vmatprep.subr.mxu0 0.0
        %645 = vmatpush1.msra.mxu0 0.0
        %646 = vmatprep.subr.mxu0 0.0
        %647 = vmatpush1.msra.mxu0 0.0
        %648 = vmatprep.subr.mxu0 0.0
        %649 = vmatpush1.msra.mxu0 0.0
        %650 = vmatprep.subr.mxu0 0.0
        %651 = vmatpush1.msra.mxu0 0.0
        %652 = vmatprep.subr.mxu0 0.0
        %653 = vmatpush1.msra.mxu0 0.0
        %654 = vmatprep.mubr.f32.mxu0 0.0
        %655 = vmatmul.mubr.f32.gmra.mrb[0].mxu0 %v588
        %v656 = vpop.f32.mrb[0].mxu0
        %v657 = vadd.f32 0.0, %v656
        %v658 = vpop.f32.mrb[0].mxu0
        %659 = vdwg.mxu0
        %660 = vrot.lane.b32.xlu0 %v321, 112
        %v661 = vpop.permute.xlu0 %660
        %662 = vrot.lane.b32.xlu0 %v318, 80
        %v663 = vpop.permute.xlu0 %662
        %v664 = vsel %vm330, %v661, 0
        %v666 = vsel %vm330, %v663, 0
        %668 = vmatprep.subr.mxu0 0.0
        %669 = vmatpush1.xpose.msra.mxu0 %v666
        %670 = vmatprep.subr.mxu0 0.0
        %671 = vmatpush1.xpose.msra.mxu0 0.0
        %672 = vmatprep.subr.mxu0 0.0
        %673 = vmatpush1.xpose.msra.mxu0 0.0
        %674 = vmatprep.subr.mxu0 0.0
        %675 = vmatpush1.xpose.msra.mxu0 0.0
        %676 = vmatprep.subr.mxu0 0.0
        %677 = vmatpush1.xpose.msra.mxu0 0.0
        %678 = vmatprep.subr.mxu0 0.0
        %679 = vmatpush1.xpose.msra.mxu0 0.0
        %680 = vmatprep.subr.mxu0 0.0
        %681 = vmatpush1.xpose.msra.mxu0 0.0
        %682 = vmatprep.subr.mxu0 0.0
        %683 = vmatpush1.xpose.msra.mxu0 0.0
        %684 = vmatprep.subr.mxu0 0.0
        %685 = vmatpush1.xpose.msra.mxu0 0.0
        %686 = vmatprep.subr.mxu0 0.0
        %687 = vmatpush1.xpose.msra.mxu0 0.0
        %688 = vmatprep.subr.mxu0 0.0
        %689 = vmatpush1.xpose.msra.mxu0 0.0
        %690 = vmatprep.subr.mxu0 0.0
        %691 = vmatpush1.xpose.msra.mxu0 0.0
        %692 = vmatprep.subr.mxu0 0.0
        %693 = vmatpush1.xpose.msra.mxu0 0.0
        %694 = vmatprep.subr.mxu0 0.0
        %695 = vmatpush1.xpose.msra.mxu0 0.0
        %696 = vmatprep.subr.mxu0 0.0
        %697 = vmatpush1.xpose.msra.mxu0 0.0
        %698 = vmatprep.subr.mxu0 0.0
        %699 = vmatpush1.xpose.msra.mxu0 0.0
        %700 = vmatprep.subr.mxu0 0.0
        %701 = vmatpush1.xpose.msra.mxu0 0.0
        %702 = vmatprep.subr.mxu0 0.0
        %703 = vmatpush1.xpose.msra.mxu0 0.0
        %704 = vmatprep.subr.mxu0 0.0
        %705 = vmatpush1.xpose.msra.mxu0 0.0
        %706 = vmatprep.subr.mxu0 0.0
        %707 = vmatpush1.xpose.msra.mxu0 0.0
        %708 = vmatprep.subr.mxu0 0.0
        %709 = vmatpush1.xpose.msra.mxu0 0.0
        %710 = vmatprep.subr.mxu0 0.0
        %711 = vmatpush1.xpose.msra.mxu0 0.0
        %712 = vmatprep.subr.mxu0 0.0
        %713 = vmatpush1.xpose.msra.mxu0 0.0
        %714 = vmatprep.subr.mxu0 0.0
        %715 = vmatpush1.xpose.msra.mxu0 0.0
        %716 = vmatprep.subr.mxu0 0.0
        %717 = vmatpush1.xpose.msra.mxu0 0.0
        %718 = vmatprep.subr.mxu0 0.0
        %719 = vmatpush1.xpose.msra.mxu0 0.0
        %720 = vmatprep.subr.mxu0 0.0
        %721 = vmatpush1.xpose.msra.mxu0 0.0
        %722 = vmatprep.subr.mxu0 0.0
        %723 = vmatpush1.xpose.msra.mxu0 0.0
        %724 = vmatprep.subr.mxu0 0.0
        %725 = vmatpush1.xpose.msra.mxu0 0.0
        %726 = vmatprep.subr.mxu0 0.0
        %727 = vmatpush1.xpose.msra.mxu0 0.0
        %728 = vmatprep.subr.mxu0 0.0
        %729 = vmatpush1.xpose.msra.mxu0 0.0
        %730 = vmatprep.subr.mxu0 0.0
        %731 = vmatpush1.xpose.msra.mxu0 0.0
        %732 = vmatprep.mubr.f32.mxu0 0.0
        %733 = vmatmul.mubr.f32.gmra.mrb[0].mxu0 %v664
        %v734 = vpop.f32.mrb[0].mxu0
        %v735 = vadd.f32 0.0, %v734
        %v736 = vpop.f32.mrb[0].mxu0
        %737 = vdwg.mxu0
        %v738 = vsel %vm326, %v735, -1e+30
        %v739 = vsel %vm330, %v738, -inf
        %740 = vmax.xlane.f32.xlu0 %v739
        %v741 = vpop.xlane.xlu0 %740
        %v742 = vsub.f32 %v738, %v741
        %v743 = vmul.f32 %v742, 1.442695
        %v744 = vpow.pop %v743
        %v745 = vsel %vm330, %v744, 0.0
        %746 = vadd.xlane.f32.xlu0 %v745
        %v747 = vpop.xlane.xlu0 %746
        %v748 = vrcp.pop %v747
        %v749 = vmul.f32 %v744, %v748
        %750 = vrot.lane.b32.xlu0 %v318, 48
        %v751 = vpop.permute.xlu0 %750
        %v754 = vsel %vm330, %v749, 0
        %756 = vmatprep.subr.mxu0 0.0
        %757 = vmatpush1.msra.mxu0 %v751
        %758 = vmatprep.subr.mxu0 0.0
        %759 = vmatpush1.msra.mxu0 0.0
        %760 = vmatprep.subr.mxu0 0.0
        %761 = vmatpush1.msra.mxu0 0.0
        %762 = vmatprep.subr.mxu0 0.0
        %763 = vmatpush1.msra.mxu0 0.0
        %764 = vmatprep.subr.mxu0 0.0
        %765 = vmatpush1.msra.mxu0 0.0
        %766 = vmatprep.subr.mxu0 0.0
        %767 = vmatpush1.msra.mxu0 0.0
        %768 = vmatprep.subr.mxu0 0.0
        %769 = vmatpush1.msra.mxu0 0.0
        %770 = vmatprep.subr.mxu0 0.0
        %771 = vmatpush1.msra.mxu0 0.0
        %772 = vmatprep.subr.mxu0 0.0
        %773 = vmatpush1.msra.mxu0 0.0
        %774 = vmatprep.subr.mxu0 0.0
        %775 = vmatpush1.msra.mxu0 0.0
        %776 = vmatprep.subr.mxu0 0.0
        %777 = vmatpush1.msra.mxu0 0.0
        %778 = vmatprep.subr.mxu0 0.0
        %779 = vmatpush1.msra.mxu0 0.0
        %780 = vmatprep.subr.mxu0 0.0
        %781 = vmatpush1.msra.mxu0 0.0
        %782 = vmatprep.subr.mxu0 0.0
        %783 = vmatpush1.msra.mxu0 0.0
        %784 = vmatprep.subr.mxu0 0.0
        %785 = vmatpush1.msra.mxu0 0.0
        %786 = vmatprep.subr.mxu0 0.0
        %787 = vmatpush1.msra.mxu0 0.0
        %788 = vmatprep.subr.mxu0 0.0
        %789 = vmatpush1.msra.mxu0 0.0
        %790 = vmatprep.subr.mxu0 0.0
        %791 = vmatpush1.msra.mxu0 0.0
        %792 = vmatprep.subr.mxu0 0.0
        %793 = vmatpush1.msra.mxu0 0.0
        %794 = vmatprep.subr.mxu0 0.0
        %795 = vmatpush1.msra.mxu0 0.0
        %796 = vmatprep.subr.mxu0 0.0
        %797 = vmatpush1.msra.mxu0 0.0
        %798 = vmatprep.subr.mxu0 0.0
        %799 = vmatpush1.msra.mxu0 0.0
        %800 = vmatprep.subr.mxu0 0.0
        %801 = vmatpush1.msra.mxu0 0.0
        %802 = vmatprep.subr.mxu0 0.0
        %803 = vmatpush1.msra.mxu0 0.0
        %804 = vmatprep.subr.mxu0 0.0
        %805 = vmatpush1.msra.mxu0 0.0
        %806 = vmatprep.subr.mxu0 0.0
        %807 = vmatpush1.msra.mxu0 0.0
        %808 = vmatprep.subr.mxu0 0.0
        %809 = vmatpush1.msra.mxu0 0.0
        %810 = vmatprep.subr.mxu0 0.0
        %811 = vmatpush1.msra.mxu0 0.0
        %812 = vmatprep.subr.mxu0 0.0
        %813 = vmatpush1.msra.mxu0 0.0
        %814 = vmatprep.subr.mxu0 0.0
        %815 = vmatpush1.msra.mxu0 0.0
        %816 = vmatprep.subr.mxu0 0.0
        %817 = vmatpush1.msra.mxu0 0.0
        %818 = vmatprep.subr.mxu0 0.0
        %819 = vmatpush1.msra.mxu0 0.0
        %820 = vmatprep.mubr.f32.mxu0 0.0
        %821 = vmatmul.mubr.f32.gmra.mrb[0].mxu0 %v754
        %v822 = vpop.f32.mrb[0].mxu0
        %v823 = vadd.f32 0.0, %v822
        %v824 = vpop.f32.mrb[0].mxu0
        %825 = vdwg.mxu0
        %826 = vrot.lane.b32.xlu0 %v321, 104
        %v827 = vpop.permute.xlu0 %826
        %828 = vrot.lane.b32.xlu0 %v318, 72
        %v829 = vpop.permute.xlu0 %828
        %v830 = vsel %vm330, %v827, 0
        %v832 = vsel %vm330, %v829, 0
        %834 = vmatprep.subr.mxu0 0.0
        %835 = vmatpush1.xpose.msra.mxu0 %v832
        %836 = vmatprep.subr.mxu0 0.0
        %837 = vmatpush1.xpose.msra.mxu0 0.0
        %838 = vmatprep.subr.mxu0 0.0
        %839 = vmatpush1.xpose.msra.mxu0 0.0
        %840 = vmatprep.subr.mxu0 0.0
        %841 = vmatpush1.xpose.msra.mxu0 0.0
        %842 = vmatprep.subr.mxu0 0.0
        %843 = vmatpush1.xpose.msra.mxu0 0.0
        %844 = vmatprep.subr.mxu0 0.0
        %845 = vmatpush1.xpose.msra.mxu0 0.0
        %846 = vmatprep.subr.mxu0 0.0
        %847 = vmatpush1.xpose.msra.mxu0 0.0
        %848 = vmatprep.subr.mxu0 0.0
        %849 = vmatpush1.xpose.msra.mxu0 0.0
        %850 = vmatprep.subr.mxu0 0.0
        %851 = vmatpush1.xpose.msra.mxu0 0.0
        %852 = vmatprep.subr.mxu0 0.0
        %853 = vmatpush1.xpose.msra.mxu0 0.0
        %854 = vmatprep.subr.mxu0 0.0
        %855 = vmatpush1.xpose.msra.mxu0 0.0
        %856 = vmatprep.subr.mxu0 0.0
        %857 = vmatpush1.xpose.msra.mxu0 0.0
        %858 = vmatprep.subr.mxu0 0.0
        %859 = vmatpush1.xpose.msra.mxu0 0.0
        %860 = vmatprep.subr.mxu0 0.0
        %861 = vmatpush1.xpose.msra.mxu0 0.0
        %862 = vmatprep.subr.mxu0 0.0
        %863 = vmatpush1.xpose.msra.mxu0 0.0
        %864 = vmatprep.subr.mxu0 0.0
        %865 = vmatpush1.xpose.msra.mxu0 0.0
        %866 = vmatprep.subr.mxu0 0.0
        %867 = vmatpush1.xpose.msra.mxu0 0.0
        %868 = vmatprep.subr.mxu0 0.0
        %869 = vmatpush1.xpose.msra.mxu0 0.0
        %870 = vmatprep.subr.mxu0 0.0
        %871 = vmatpush1.xpose.msra.mxu0 0.0
        %872 = vmatprep.subr.mxu0 0.0
        %873 = vmatpush1.xpose.msra.mxu0 0.0
        %874 = vmatprep.subr.mxu0 0.0
        %875 = vmatpush1.xpose.msra.mxu0 0.0
        %876 = vmatprep.subr.mxu0 0.0
        %877 = vmatpush1.xpose.msra.mxu0 0.0
        %878 = vmatprep.subr.mxu0 0.0
        %879 = vmatpush1.xpose.msra.mxu0 0.0
        %880 = vmatprep.subr.mxu0 0.0
        %881 = vmatpush1.xpose.msra.mxu0 0.0
        %882 = vmatprep.subr.mxu0 0.0
        %883 = vmatpush1.xpose.msra.mxu0 0.0
        %884 = vmatprep.subr.mxu0 0.0
        %885 = vmatpush1.xpose.msra.mxu0 0.0
        %886 = vmatprep.subr.mxu0 0.0
        %887 = vmatpush1.xpose.msra.mxu0 0.0
        %888 = vmatprep.subr.mxu0 0.0
        %889 = vmatpush1.xpose.msra.mxu0 0.0
        %890 = vmatprep.subr.mxu0 0.0
        %891 = vmatpush1.xpose.msra.mxu0 0.0
        %892 = vmatprep.subr.mxu0 0.0
        %893 = vmatpush1.xpose.msra.mxu0 0.0
        %894 = vmatprep.subr.mxu0 0.0
        %895 = vmatpush1.xpose.msra.mxu0 0.0
        %896 = vmatprep.subr.mxu0 0.0
        %897 = vmatpush1.xpose.msra.mxu0 0.0
        %898 = vmatprep.mubr.f32.mxu0 0.0
        %899 = vmatmul.mubr.f32.gmra.mrb[0].mxu0 %v830
        %v900 = vpop.f32.mrb[0].mxu0
        %v901 = vadd.f32 0.0, %v900
        %v902 = vpop.f32.mrb[0].mxu0
        %903 = vdwg.mxu0
        %v904 = vsel %vm326, %v901, -1e+30
        %v905 = vsel %vm330, %v904, -inf
        %906 = vmax.xlane.f32.xlu0 %v905
        %v907 = vpop.xlane.xlu0 %906
        %v908 = vsub.f32 %v904, %v907
        %v909 = vmul.f32 %v908, 1.442695
        %v910 = vpow.pop %v909
        %v911 = vsel %vm330, %v910, 0.0
        %912 = vadd.xlane.f32.xlu0 %v911
        %v913 = vpop.xlane.xlu0 %912
        %v914 = vrcp.pop %v913
        %v915 = vmul.f32 %v910, %v914
        %916 = vrot.lane.b32.xlu0 %v318, 40
        %v917 = vpop.permute.xlu0 %916
        %v920 = vsel %vm330, %v915, 0
        %922 = vmatprep.subr.mxu0 0.0
        %923 = vmatpush1.msra.mxu0 %v917
        %924 = vmatprep.subr.mxu0 0.0
        %925 = vmatpush1.msra.mxu0 0.0
        %926 = vmatprep.subr.mxu0 0.0
        %927 = vmatpush1.msra.mxu0 0.0
        %928 = vmatprep.subr.mxu0 0.0
        %929 = vmatpush1.msra.mxu0 0.0
        %930 = vmatprep.subr.mxu0 0.0
        %931 = vmatpush1.msra.mxu0 0.0
        %932 = vmatprep.subr.mxu0 0.0
        %933 = vmatpush1.msra.mxu0 0.0
        %934 = vmatprep.subr.mxu0 0.0
        %935 = vmatpush1.msra.mxu0 0.0
        %936 = vmatprep.subr.mxu0 0.0
        %937 = vmatpush1.msra.mxu0 0.0
        %938 = vmatprep.subr.mxu0 0.0
        %939 = vmatpush1.msra.mxu0 0.0
        %940 = vmatprep.subr.mxu0 0.0
        %941 = vmatpush1.msra.mxu0 0.0
        %942 = vmatprep.subr.mxu0 0.0
        %943 = vmatpush1.msra.mxu0 0.0
        %944 = vmatprep.subr.mxu0 0.0
        %945 = vmatpush1.msra.mxu0 0.0
        %946 = vmatprep.subr.mxu0 0.0
        %947 = vmatpush1.msra.mxu0 0.0
        %948 = vmatprep.subr.mxu0 0.0
        %949 = vmatpush1.msra.mxu0 0.0
        %950 = vmatprep.subr.mxu0 0.0
        %951 = vmatpush1.msra.mxu0 0.0
        %952 = vmatprep.subr.mxu0 0.0
        %953 = vmatpush1.msra.mxu0 0.0
        %954 = vmatprep.subr.mxu0 0.0
        %955 = vmatpush1.msra.mxu0 0.0
        %956 = vmatprep.subr.mxu0 0.0
        %957 = vmatpush1.msra.mxu0 0.0
        %958 = vmatprep.subr.mxu0 0.0
        %959 = vmatpush1.msra.mxu0 0.0
        %960 = vmatprep.subr.mxu0 0.0
        %961 = vmatpush1.msra.mxu0 0.0
        %962 = vmatprep.subr.mxu0 0.0
        %963 = vmatpush1.msra.mxu0 0.0
        %964 = vmatprep.subr.mxu0 0.0
        %965 = vmatpush1.msra.mxu0 0.0
        %966 = vmatprep.subr.mxu0 0.0
        %967 = vmatpush1.msra.mxu0 0.0
        %968 = vmatprep.subr.mxu0 0.0
        %969 = vmatpush1.msra.mxu0 0.0
        %970 = vmatprep.subr.mxu0 0.0
        %971 = vmatpush1.msra.mxu0 0.0
        %972 = vmatprep.subr.mxu0 0.0
        %973 = vmatpush1.msra.mxu0 0.0
        %974 = vmatprep.subr.mxu0 0.0
        %975 = vmatpush1.msra.mxu0 0.0
        %976 = vmatprep.subr.mxu0 0.0
        %977 = vmatpush1.msra.mxu0 0.0
        %978 = vmatprep.subr.mxu0 0.0
        %979 = vmatpush1.msra.mxu0 0.0
        %980 = vmatprep.subr.mxu0 0.0
        %981 = vmatpush1.msra.mxu0 0.0
        %982 = vmatprep.subr.mxu0 0.0
        %983 = vmatpush1.msra.mxu0 0.0
        %984 = vmatprep.subr.mxu0 0.0
        %985 = vmatpush1.msra.mxu0 0.0
        %986 = vmatprep.mubr.f32.mxu0 0.0
        %987 = vmatmul.mubr.f32.gmra.mrb[0].mxu0 %v920
        %v988 = vpop.f32.mrb[0].mxu0
        %v989 = vadd.f32 0.0, %v988
        %v990 = vpop.f32.mrb[0].mxu0
        %991 = vdwg.mxu0
        %993 = vrot.lane.b32.xlu0 %v657, 8
        %v994 = vpop.permute.xlu0 %993
        %997 = vrot.lane.b32.xlu0 %v823, 16
        %v998 = vpop.permute.xlu0 %997
        %1001 = vrot.lane.b32.xlu0 %v989, 24
        %v1002 = vpop.permute.xlu0 %1001
        %v1004 = vsel %vm330, %v491, %v994
        %vm1005 = vcmask 130048
        %v1006 = vsel %vm1005, %v1004, %v998
        %vm1007 = vcmask 195584
        %v1008 = vsel %vm1007, %v1006, %v1002
        %v1009 = vld [vmem:[#allocation7] sm:$0xff]
        %v1010 = vld [vmem:[#allocation7 + $0x8] sm:$0xff]
        %v1011 = vld [vmem:[#allocation7 + $0x10] sm:$0xff]
        %v1012 = vld [vmem:[#allocation7 + $0x18] sm:$0xff]
        %v1013 = vld [vmem:[%s3] sm:$0x1]
        %v1015 = vlaneseq
        %v1016 = vshrl.u32 %v1015, 7
        %v1017 = vsub.s32 0, %v1016
        %v1018 = vrot.slane %v1013, %v1017
        %v1021 = vsel %vm247, %v1008, 0
        %1023 = vmatprep.subr.mxu0 0.0
        %1024 = vmatpush1.msra.mxu0 %v1009
        %1025 = vmatprep.subr.mxu0 0.0
        %1026 = vmatpush1.msra.mxu0 %v1010
        %1027 = vmatprep.subr.mxu0 0.0
        %1028 = vmatpush1.msra.mxu0 %v1011
        %1029 = vmatprep.subr.mxu0 0.0
        %1030 = vmatpush1.msra.mxu0 %v1012
        %1031 = vmatprep.subr.mxu0 0.0
        %1032 = vmatpush1.msra.mxu0 0.0
        %1033 = vmatprep.subr.mxu0 0.0
        %1034 = vmatpush1.msra.mxu0 0.0
        %1035 = vmatprep.subr.mxu0 0.0
        %1036 = vmatpush1.msra.mxu0 0.0
        %1037 = vmatprep.subr.mxu0 0.0
        %1038 = vmatpush1.msra.mxu0 0.0
        %1039 = vmatprep.subr.mxu0 0.0
        %1040 = vmatpush1.msra.mxu0 0.0
        %1041 = vmatprep.subr.mxu0 0.0
        %1042 = vmatpush1.msra.mxu0 0.0
        %1043 = vmatprep.subr.mxu0 0.0
        %1044 = vmatpush1.msra.mxu0 0.0
        %1045 = vmatprep.subr.mxu0 0.0
        %1046 = vmatpush1.msra.mxu0 0.0
        %1047 = vmatprep.subr.mxu0 0.0
        %1048 = vmatpush1.msra.mxu0 0.0
        %1049 = vmatprep.subr.mxu0 0.0
        %1050 = vmatpush1.msra.mxu0 0.0
        %1051 = vmatprep.subr.mxu0 0.0
        %1052 = vmatpush1.msra.mxu0 0.0
        %1053 = vmatprep.subr.mxu0 0.0
        %1054 = vmatpush1.msra.mxu0 0.0
        %1055 = vmatprep.subr.mxu0 0.0
        %1056 = vmatpush1.msra.mxu0 0.0
        %1057 = vmatprep.subr.mxu0 0.0
        %1058 = vmatpush1.msra.mxu0 0.0
        %1059 = vmatprep.subr.mxu0 0.0
        %1060 = vmatpush1.msra.mxu0 0.0
        %1061 = vmatprep.subr.mxu0 0.0
        %1062 = vmatpush1.msra.mxu0 0.0
        %1063 = vmatprep.subr.mxu0 0.0
        %1064 = vmatpush1.msra.mxu0 0.0
        %1065 = vmatprep.subr.mxu0 0.0
        %1066 = vmatpush1.msra.mxu0 0.0
        %1067 = vmatprep.subr.mxu0 0.0
        %1068 = vmatpush1.msra.mxu0 0.0
        %1069 = vmatprep.subr.mxu0 0.0
        %1070 = vmatpush1.msra.mxu0 0.0
        %1071 = vmatprep.subr.mxu0 0.0
        %1072 = vmatpush1.msra.mxu0 0.0
        %1073 = vmatprep.subr.mxu0 0.0
        %1074 = vmatpush1.msra.mxu0 0.0
        %1075 = vmatprep.subr.mxu0 0.0
        %1076 = vmatpush1.msra.mxu0 0.0
        %1077 = vmatprep.subr.mxu0 0.0
        %1078 = vmatpush1.msra.mxu0 0.0
        %1079 = vmatprep.subr.mxu0 0.0
        %1080 = vmatpush1.msra.mxu0 0.0
        %1081 = vmatprep.subr.mxu0 0.0
        %1082 = vmatpush1.msra.mxu0 0.0
        %1083 = vmatprep.subr.mxu0 0.0
        %1084 = vmatpush1.msra.mxu0 0.0
        %1085 = vmatprep.subr.mxu0 0.0
        %1086 = vmatpush1.msra.mxu0 0.0
        %1087 = vmatprep.mubr.f32.mxu0 0.0
        %1088 = vmatmul.mubr.f32.gmra.mrb[0].mxu0 %v1021
        %v1089 = vpop.f32.mrb[0].mxu0
        %v1090 = vadd.f32 %v1018, %v1089
        %v1091 = vpop.f32.mrb[0].mxu0
        %1092 = vdwg.mxu0
        %1093 = vst.msk [vmem:[%s241] sm:$0xff] %vm247, %v1090
        %s1094 = sand.u32 %s119, 1
        %s1095 = scalar_lea.sflag [#allocation4], %s1094
        %s1096 = sand.u32 %s119, 1
        %s1097 = smul.addr %s1096, 8
        %s1098 = scalar_lea.vmem [#allocation8], %s1097
        // Predicated region
        $region49: #{tpu_custom_call.1} parent=35 // pred_check
          %p1099 = pneg %p129
        $region50: #{tpu_custom_call.1} parent=35 // pred_check_branch
          %1101 = sbr.rel (%p1099) target = $region52
        $region51: #{tpu_custom_call.1} parent=35 // pred_region
          %s1103 = ssub.s32 128, 128
          %1104 = vsyncadd %s1095, %s1103
          %s1105 = smul.addr %s22, 128
          %s1106 = scalar_lea.hbm %s4, %s1105
          %s1108 = sshll.u32 %s1098, 4
          %s1109 = int_to_ptr.vmem [resolvable:$true] %s1108
          %1111 = dma.vmem_to_hbm [thread:$0]  %s1109, 128, %s1106, %s1095
        $region52: #{tpu_custom_call.1} parent=35 // pred_fallthru
          _
      $region36: #{tpu_custom_call.1} parent=5 // pred_fallthru
        _
      %p1112 = scmp.le.s32.totalorder 2, %s17
      // Predicated region
      $region53: #{tpu_custom_call.1} parent=5 // pred_check
        %p1113 = pneg %p1112
      $region54: #{tpu_custom_call.1} parent=5 // pred_check_branch
        %1115 = sbr.rel (%p1113) target = $region56
      $region55: #{tpu_custom_call.1} parent=5 // pred_region
        %s1116 = ssub.s32 %s17, 2
        // Predicated region
        $region57: #{tpu_custom_call.1} parent=55 // pred_check
          %p1117 = pneg %p135
        $region58: #{tpu_custom_call.1} parent=55 // pred_check_branch
          %1119 = sbr.rel (%p1117) target = $region60
        $region59: #{tpu_custom_call.1} parent=55 // pred_region
          %s1120 = sand.u32 %s120, 1
          %s1121 = scalar_lea.sflag [#allocation4], %s1120
          %s1122 = sand.u32 %s120, 1
          %s1123 = smul.addr %s1122, 8
          %s1124 = scalar_lea.vmem [#allocation8], %s1123
          %1125 = dma.done %s1121, 128
        $region60: #{tpu_custom_call.1} parent=55 // pred_fallthru
          _
      $region56: #{tpu_custom_call.1} parent=5 // pred_fallthru
        _
    $region6: #{tpu_custom_call.1} parent=1 // loop_footer
      %s21 = sadd.s32 1, %s17
    $region7: #{tpu_custom_call.1} parent=1 // loop_footer_branch
      %16 = sbr.rel target = $region3
    $region8: #{tpu_custom_call.1} parent=1 // loop_exit
      _
    %1126 = vsyncpa [#allocation3], 1
    %s1127 = scalar_lea.sflag [#allocation3], 1
    %1128 = vsyncpa %s1127, 1
    %1129 = vsyncpa [#allocation6], 1
    %1130 = vsyncpa [#allocation4], 1
    %s1131 = scalar_lea.sflag [#allocation4], 1
    %1132 = vsyncpa %s1131, 1

</llo_original>
